<compile_context>
chip_gen: v5e
topology: v5e:2x2
jax: 0.10.0
libtpu: 0.0.40
codegen_flags: <defaults>
</compile_context>

<pallas_src>
import functools

import jax
import jax.numpy as jnp
from jax import lax
from jax.experimental import pallas as pl
from jax.experimental.pallas import tpu as pltpu

INF = 1.0e12


def _round_up(x, m):
    return ((x + m - 1) // m) * m


# ----------------------------- Pallas kernel ------------------------------- #
def _sinkhorn_kernel(norm_ref, scores_ref, log_mu_ref, log_nu_ref, out_ref, *,
                     num_iter, bt):
    """One grid step = `bt` batch elements, whole padded slab resident in VMEM.

    norm_ref   : SMEM (B,)         f32  (scalar prefetch)
    scores_ref : VMEM (bt, Mp, Np) f32  padded + masked scores
    log_mu_ref : VMEM (bt, Mp, 1)  f32
    log_nu_ref : VMEM (bt, 1,  Np) f32
    out_ref    : VMEM (bt, Mp, Np) f32
    """
    s = scores_ref[...]
    mu = log_mu_ref[...]
    nu = log_nu_ref[...]

    # Hoist the full-slab exp out of the Sinkhorn loop (stabilized-kernel
    # form).  Masked / tiling-padded cells hold -INF, so for any row/col with
    # at least one valid cell E_* underflows to exactly 0 there and those
    # cells drop out of the weighted sums - same effect as true log-domain
    # logsumexp (validated against the pure-JAX reference below).
    rmax = jnp.max(s, axis=2, keepdims=True)      # (bt, Mp, 1)
    cmax = jnp.max(s, axis=1, keepdims=True)      # (bt, 1,  Np)
    e_row = jnp.exp(s - rmax)                     # (bt, Mp, Np)
    e_col = jnp.exp(s - cmax)                     # (bt, Mp, Np)

    def body(_, carry):
        u, v = carry                              # (bt,Mp,1), (bt,1,Np)
        # u = log_mu - logsumexp_j(s + v)
        vm = jnp.max(v, axis=2, keepdims=True)                    # (bt,1,1)
        wv = jnp.exp(v - vm)                                      # (bt,1,Np)
        row_sum = jnp.sum(e_row * wv, axis=2, keepdims=True)      # (bt,Mp,1)
        u = mu - (rmax + vm + jnp.log(row_sum))
        # v = log_nu - logsumexp_i(s + u)
        um = jnp.max(u, axis=1, keepdims=True)                    # (bt,1,1)
        wu = jnp.exp(u - um)                                      # (bt,Mp,1)
        col_sum = jnp.sum(e_col * wu, axis=1, keepdims=True)      # (bt,1,Np)
        v = nu - (cmax + um + jnp.log(col_sum))
        return u, v

    u0 = jnp.zeros_like(mu)
    v0 = jnp.zeros_like(nu)
    u, v = lax.fori_loop(0, num_iter, body, (u0, v0))

    res = s + u + v                               # (bt, Mp, Np)
    b0 = pl.program_id(0) * bt
    for i in range(bt):                           # static unroll: per-batch norm
        out_ref[i] = res[i] - norm_ref[b0 + i]


def _choose_batch_tile(batch, mp, np_, vmem_budget_bytes=12 * 1024 * 1024):
    """Largest divisor of `batch` whose resident VMEM footprint fits the
    budget, while keeping >= 2 grid steps when possible (v7x has 2 TCs)."""
    slab = mp * np_ * 4
    # double-buffered in + out (4x) + hoisted e_row/e_col + temporaries (~4x)
    per_b = 8 * slab + 8 * (mp + np_) * 4
    max_bt = max(1, vmem_budget_bytes // per_b)
    best = 1
    for bt in range(1, batch + 1):
        if batch % bt:
            continue
        if bt > max_bt:
            continue
        if batch // bt < 2 and batch > 1:
            continue
        best = max(best, bt)
    return best


def _sinkhorn_pallas(padded_scores, log_mu, log_nu, norm, num_iter):
    B, Mp, Np = padded_scores.shape
    bt = _choose_batch_tile(B, Mp, Np)
    slab = Mp * Np * 4
    # Explicit VMEM limit with headroom; capped below v7x's 64 MiB physical.
    vmem_limit = int(min(56 * 1024 * 1024,
                         max(16 * 1024 * 1024, 10 * bt * slab)))
    # TODO(synk): for very large (M, N) where even bt=1 overflows VMEM, switch
    # the slab in/out specs to pipeline_mode=pl.Buffered(1) (compute per block
    # is ~num_iter full-slab passes, so DMA hides without double buffering).
    kernel = functools.partial(_sinkhorn_kernel, num_iter=num_iter, bt=bt)
    return pl.pallas_call(
        kernel,
        out_shape=jax.ShapeDtypeStruct((B, Mp, Np), jnp.float32),
        grid_spec=pltpu.PrefetchScalarGridSpec(
            num_scalar_prefetch=1,                 # norm -> SMEM
            grid=(B // bt,),
            in_specs=[
                pl.BlockSpec((bt, Mp, Np), lambda b, _: (b, 0, 0)),
                pl.BlockSpec((bt, Mp, 1), lambda b, _: (b, 0, 0)),
                pl.BlockSpec((bt, 1, Np), lambda b, _: (b, 0, 0)),
            ],
            out_specs=pl.BlockSpec((bt, Mp, Np), lambda b, _: (b, 0, 0)),
        ),
        compiler_params=pltpu.CompilerParams(
            dimension_semantics=("parallel",),
            vmem_limit_bytes=vmem_limit),
    )(
        norm.astype(jnp.float32),
        padded_scores.astype(jnp.float32),
        log_mu.reshape(B, Mp, 1).astype(jnp.float32),
        log_nu.reshape(B, 1, Np).astype(jnp.float32),
    )


# ------------------------------ module glue -------------------------------- #
def _build_padded_problem(scores, row_masks, col_masks, alpha, inf=INF):
    """Plain-JAX padding / masking glue (mirrors the PyTorch forward), built
    directly at tiling-friendly sizes Mp (mult. of 8) x Np (mult. of 128)."""
    B, M, N = scores.shape
    M1, N1 = M + 1, N + 1
    Mp = _round_up(M1, 8)
    Np = _round_up(N1, 128)
    ninf = jnp.float32(-inf)
    alpha_f = jnp.asarray(alpha, jnp.float32)

    # True = participates.  Dustbin row/col always valid; tiling padding never.
    row_valid = jnp.concatenate(
        [row_masks, jnp.ones((B, 1), dtype=bool),
         jnp.zeros((B, Mp - M1), dtype=bool)], axis=1)            # (B, Mp)
    col_valid = jnp.concatenate(
        [col_masks, jnp.ones((B, 1), dtype=bool),
         jnp.zeros((B, Np - N1), dtype=bool)], axis=1)            # (B, Np)

    slab = jnp.broadcast_to(alpha_f, (B, Mp, Np))
    slab = slab.at[:, :M, :N].set(scores.astype(jnp.float32))
    cell_valid = row_valid[:, :, None] & col_valid[:, None, :]
    padded_scores = jnp.where(cell_valid, slab, ninf)             # (B, Mp, Np)

    num_valid_row = row_masks.astype(jnp.float32).sum(axis=1)     # (B,)
    num_valid_col = col_masks.astype(jnp.float32).sum(axis=1)     # (B,)
    norm = -jnp.log(num_valid_row + num_valid_col)                # (B,)

    log_mu = jnp.concatenate(
        [jnp.broadcast_to(norm[:, None], (B, M)),
         (jnp.log(num_valid_col) + norm)[:, None],
         jnp.full((B, Mp - M1), ninf)], axis=1)                   # (B, Mp)
    log_mu = jnp.where(row_valid, log_mu, ninf)

    log_nu = jnp.concatenate(
        [jnp.broadcast_to(norm[:, None], (B, N)),
         (jnp.log(num_valid_row) + norm)[:, None],
         jnp.full((B, Np - N1), ninf)], axis=1)                   # (B, Np)
    log_nu = jnp.where(col_valid, log_nu, ninf)

    return padded_scores, log_mu, log_nu, norm, M1, N1


def learnable_log_optimal_transport(scores, row_masks, col_masks, alpha,
                                    num_iter, inf=INF):
    """Forward pass of LearnableLogOptimalTransport.

    scores: (B, M, N) f32; row_masks: (B, M) bool; col_masks: (B, N) bool.
    Returns (B, M+1, N+1) f32.
    """
    padded_scores, log_mu, log_nu, norm, M1, N1 = _build_padded_problem(
        scores, row_masks, col_masks, alpha, inf)
    out = _sinkhorn_pallas(padded_scores, log_mu, log_nu, norm, num_iter)
    return out[:, :M1, :N1]


# -------------------------- pure-JAX reference ----------------------------- #
def _lse(x, axis):
    m = jnp.max(x, axis=axis, keepdims=True)
    return jnp.squeeze(m, axis) + jnp.log(jnp.sum(jnp.exp(x - m), axis=axis))


def _reference(scores, row_masks, col_masks, alpha, num_iter, inf=INF):
    """Exact mirror of the PyTorch forward (true log-domain logsumexp)."""
    B, M, N = scores.shape
    ninf = jnp.float32(-inf)
    alpha_f = jnp.asarray(alpha, jnp.float32)
    padded_row_masks = jnp.concatenate(
        [~row_masks, jnp.zeros((B, 1), dtype=bool)], axis=1)
    padded_col_masks = jnp.concatenate(
        [~col_masks, jnp.zeros((B, 1), dtype=bool)], axis=1)
    padded_col = jnp.broadcast_to(alpha_f, (B, M, 1))
    padded_row = jnp.broadcast_to(alpha_f, (B, 1, N + 1))
    ps = jnp.concatenate(
        [jnp.concatenate([scores.astype(jnp.float32), padded_col], axis=-1),
         padded_row], axis=1)
    mask = padded_row_masks[:, :, None] | padded_col_masks[:, None, :]
    ps = jnp.where(mask, ninf, ps)
    nvr = row_masks.astype(jnp.float32).sum(axis=1)
    nvc = col_masks.astype(jnp.float32).sum(axis=1)
    norm = -jnp.log(nvr + nvc)
    log_mu = jnp.concatenate([jnp.broadcast_to(norm[:, None], (B, M)),
                              (jnp.log(nvc) + norm)[:, None]], axis=1)
    log_mu = jnp.where(padded_row_masks, ninf, log_mu)
    log_nu = jnp.concatenate([jnp.broadcast_to(norm[:, None], (B, N)),
                              (jnp.log(nvr) + norm)[:, None]], axis=1)
    log_nu = jnp.where(padded_col_masks, ninf, log_nu)
    u = jnp.zeros_like(log_mu)
    v = jnp.zeros_like(log_nu)
    for _ in range(num_iter):
        u = log_mu - _lse(ps + v[:, None, :], axis=2)
        v = log_nu - _lse(ps + u[:, :, None], axis=1)
    return ps + u[:, :, None] + v[:, None, :] - norm[:, None, None]


# ---------------------------------- main ------------------------------------ #
if __name__ == "__main__":
    key = jax.random.PRNGKey(0)
    k1, k2, k3 = jax.random.split(key, 3)

    B, M, N = 2, 12, 20
    num_iter = 20
    alpha = jnp.float32(1.0)  # deterministic init, matches torch Parameter(1.0)

    scores = jax.random.normal(k1, (B, M, N), dtype=jnp.float32)
    row_masks = jax.random.bernoulli(k2, 0.7, (B, M))
    col_masks = jax.random.bernoulli(k3, 0.7, (B, N))
    # guarantee at least one valid row/col per batch (avoid log(0) in norm)
    row_masks = row_masks.at[:, 0].set(True)
    col_masks = col_masks.at[:, 0].set(True)

    out = learnable_log_optimal_transport(scores, row_masks, col_masks, alpha,
                                          num_iter)
    out = jax.block_until_ready(out)

    ref = _reference(scores, row_masks, col_masks, alpha, num_iter)
    assert out.shape == (B, M + 1, N + 1)
    assert jnp.allclose(out, ref, rtol=1e-3, atol=1e-3), "mismatch vs reference"

    print("KERNEL_OK")
</pallas_src>

<mosaic_0001>
module attributes {stable_mosaic.version = 11 : i64} {
  func.func @_sinkhorn_kernel(%arg0: i32, %arg1: memref<2xf32, #tpu.memory_space<smem>>, %arg2: memref<1x16x128xf32, #tpu.memory_space<vmem>>, %arg3: memref<1x16x1xf32, #tpu.memory_space<vmem>>, %arg4: memref<1x1x128xf32, #tpu.memory_space<vmem>>, %arg5: memref<1x16x128xf32, #tpu.memory_space<vmem>>) attributes {dimension_semantics = [#tpu.dimension_semantics<parallel>], iteration_bounds = array<i64: 2>, scalar_prefetch = 1 : i64, scratch_operands = 0 : i64, tpu.core_type = #tpu.core_type<tc>, window_params = [{transform_indices = @transform_0, window_bounds = array<i64: 1, 16, 128>}, {transform_indices = @transform_1, window_bounds = array<i64: 1, 16, 1>}, {transform_indices = @transform_2, window_bounds = array<i64: 1, 1, 128>}, {transform_indices = @transform_3, window_bounds = array<i64: 1, 16, 128>}]} {
    %c0 = arith.constant 0 : index
    %c0_0 = arith.constant 0 : index
    %c0_1 = arith.constant 0 : index
    %0 = vector.load %arg2[%c0, %c0_0, %c0_1] : memref<1x16x128xf32, #tpu.memory_space<vmem>>, vector<1x16x128xf32>
    %c0_2 = arith.constant 0 : index
    %c0_3 = arith.constant 0 : index
    %c0_4 = arith.constant 0 : index
    %1 = vector.load %arg3[%c0_2, %c0_3, %c0_4] : memref<1x16x1xf32, #tpu.memory_space<vmem>>, vector<1x16x1xf32>
    %c0_5 = arith.constant 0 : index
    %c0_6 = arith.constant 0 : index
    %c0_7 = arith.constant 0 : index
    %2 = vector.load %arg4[%c0_5, %c0_6, %c0_7] : memref<1x1x128xf32, #tpu.memory_space<vmem>>, vector<1x1x128xf32>
    %cst = arith.constant dense<0xFF800000> : vector<1x16xf32>
    %3 = vector.multi_reduction <maximumf>, %0, %cst [2] : vector<1x16x128xf32> to vector<1x16xf32>
    %4 = vector.shape_cast %3 : vector<1x16xf32> to vector<1x16x1xf32>
    %cst_8 = arith.constant dense<0xFF800000> : vector<1x128xf32>
    %5 = vector.multi_reduction <maximumf>, %0, %cst_8 [1] : vector<1x16x128xf32> to vector<1x128xf32>
    %6 = vector.shape_cast %5 : vector<1x128xf32> to vector<1x1x128xf32>
    %7 = vector.broadcast %4 : vector<1x16x1xf32> to vector<1x16x128xf32>
    %8 = arith.subf %0, %7 : vector<1x16x128xf32>
    %9 = math.exp %8 : vector<1x16x128xf32>
    %10 = vector.broadcast %6 : vector<1x1x128xf32> to vector<1x16x128xf32>
    %11 = arith.subf %0, %10 : vector<1x16x128xf32>
    %12 = math.exp %11 : vector<1x16x128xf32>
    %cst_9 = arith.constant 0.000000e+00 : f32
    %13 = vector.broadcast %cst_9 : f32 to vector<1x16x1xf32>
    %cst_10 = arith.constant 0.000000e+00 : f32
    %14 = vector.broadcast %cst_10 : f32 to vector<1x1x128xf32>
    %c0_i32 = arith.constant 0 : i32
    %c20_i32 = arith.constant 20 : i32
    %15 = arith.addi %c0_i32, %c20_i32 : i32
    %c1_i32 = arith.constant 1 : i32
    %16:2 = scf.for %arg6 = %c0_i32 to %15 step %c1_i32 iter_args(%arg7 = %13, %arg8 = %14) -> (vector<1x16x1xf32>, vector<1x1x128xf32>)  : i32 {
      %cst_16 = arith.constant dense<0xFF800000> : vector<1x1xf32>
      %31 = vector.multi_reduction <maximumf>, %arg8, %cst_16 [2] : vector<1x1x128xf32> to vector<1x1xf32>
      %32 = vector.shape_cast %31 : vector<1x1xf32> to vector<1x1x1xf32>
      %33 = vector.broadcast %32 : vector<1x1x1xf32> to vector<1x1x128xf32>
      %34 = arith.subf %arg8, %33 : vector<1x1x128xf32>
      %35 = math.exp %34 : vector<1x1x128xf32>
      %36 = vector.broadcast %35 : vector<1x1x128xf32> to vector<1x16x128xf32>
      %37 = arith.mulf %9, %36 : vector<1x16x128xf32>
      %cst_17 = arith.constant dense<0.000000e+00> : vector<1x16xf32>
      %38 = vector.multi_reduction <add>, %37, %cst_17 [2] : vector<1x16x128xf32> to vector<1x16xf32>
      %39 = vector.shape_cast %38 : vector<1x16xf32> to vector<1x16x1xf32>
      %40 = vector.broadcast %32 : vector<1x1x1xf32> to vector<1x16x1xf32>
      %41 = arith.addf %4, %40 : vector<1x16x1xf32>
      %42 = math.log %39 : vector<1x16x1xf32>
      %43 = arith.addf %41, %42 : vector<1x16x1xf32>
      %44 = arith.subf %1, %43 : vector<1x16x1xf32>
      %cst_18 = arith.constant dense<0xFF800000> : vector<1x1xf32>
      %45 = vector.multi_reduction <maximumf>, %44, %cst_18 [1] : vector<1x16x1xf32> to vector<1x1xf32>
      %46 = vector.shape_cast %45 : vector<1x1xf32> to vector<1x1x1xf32>
      %47 = vector.broadcast %46 : vector<1x1x1xf32> to vector<1x16x1xf32>
      %48 = arith.subf %44, %47 : vector<1x16x1xf32>
      %49 = math.exp %48 : vector<1x16x1xf32>
      %50 = vector.broadcast %49 : vector<1x16x1xf32> to vector<1x16x128xf32>
      %51 = arith.mulf %12, %50 : vector<1x16x128xf32>
      %cst_19 = arith.constant dense<0.000000e+00> : vector<1x128xf32>
      %52 = vector.multi_reduction <add>, %51, %cst_19 [1] : vector<1x16x128xf32> to vector<1x128xf32>
      %53 = vector.shape_cast %52 : vector<1x128xf32> to vector<1x1x128xf32>
      %54 = vector.broadcast %46 : vector<1x1x1xf32> to vector<1x1x128xf32>
      %55 = arith.addf %6, %54 : vector<1x1x128xf32>
      %56 = math.log %53 : vector<1x1x128xf32>
      %57 = arith.addf %55, %56 : vector<1x1x128xf32>
      %58 = arith.subf %2, %57 : vector<1x1x128xf32>
      scf.yield %44, %58 : vector<1x16x1xf32>, vector<1x1x128xf32>
    }
    %17 = vector.broadcast %16#0 : vector<1x16x1xf32> to vector<1x16x128xf32>
    %18 = arith.addf %0, %17 : vector<1x16x128xf32>
    %19 = vector.broadcast %16#1 : vector<1x1x128xf32> to vector<1x16x128xf32>
    %20 = arith.addf %18, %19 : vector<1x16x128xf32>
    %c1_i32_11 = arith.constant 1 : i32
    %21 = arith.muli %arg0, %c1_i32_11 : i32
    %22 = vector.shape_cast %20 : vector<1x16x128xf32> to vector<16x128xf32>
    %c0_i32_12 = arith.constant 0 : i32
    %23 = arith.addi %21, %c0_i32_12 : i32
    %24 = arith.index_cast %23 : i32 to index
    %25 = memref.load %arg1[%24] : memref<2xf32, #tpu.memory_space<smem>>
    %26 = vector.broadcast %25 : f32 to vector<16x128xf32>
    %27 = arith.subf %22, %26 : vector<16x128xf32>
    %c0_13 = arith.constant 0 : index
    %c0_14 = arith.constant 0 : index
    %c0_15 = arith.constant 0 : index
    %28 = vector.load %arg5[%c0_13, %c0_14, %c0_15] : memref<1x16x128xf32, #tpu.memory_space<vmem>>, vector<1x16x128xf32>
    %29 = vector.shape_cast %28 : vector<1x16x128xf32> to vector<16x128xf32>
    %30 = vector.shape_cast %27 : vector<16x128xf32> to vector<1x16x128xf32>
    tpu.vector_store %arg5[%c0_13, %c0_14, %c0_15], %30 {strides = array<i32>} : memref<1x16x128xf32, #tpu.memory_space<vmem>>, vector<1x16x128xf32>,
    return
  }
  func.func @transform_0(%arg0: i32, %arg1: memref<2xf32, #tpu.memory_space<smem>>) -> (i32, i32, i32) {
    %c0_i32 = arith.constant 0 : i32
    %c0_i32_0 = arith.constant 0 : i32
    %c0_i32_1 = arith.constant 0 : i32
    return %arg0, %c0_i32, %c0_i32_0 : i32, i32, i32
  }
  func.func @transform_1(%arg0: i32, %arg1: memref<2xf32, #tpu.memory_space<smem>>) -> (i32, i32, i32) {
    %c0_i32 = arith.constant 0 : i32
    %c0_i32_0 = arith.constant 0 : i32
    %c0_i32_1 = arith.constant 0 : i32
    return %arg0, %c0_i32, %c0_i32_0 : i32, i32, i32
  }
  func.func @transform_2(%arg0: i32, %arg1: memref<2xf32, #tpu.memory_space<smem>>) -> (i32, i32, i32) {
    %c0_i32 = arith.constant 0 : i32
    %c0_i32_0 = arith.constant 0 : i32
    %c0_i32_1 = arith.constant 0 : i32
    return %arg0, %c0_i32, %c0_i32_0 : i32, i32, i32
  }
  func.func @transform_3(%arg0: i32, %arg1: memref<2xf32, #tpu.memory_space<smem>>) -> (i32, i32, i32) {
    %c0_i32 = arith.constant 0 : i32
    %c0_i32_0 = arith.constant 0 : i32
    %c0_i32_1 = arith.constant 0 : i32
    return %arg0, %c0_i32, %c0_i32_0 : i32, i32, i32
  }
}

</mosaic_0001>

<llo_original>
// kernel: tpu_custom_call.1
$region0: #{tpu_custom_call.1}
  #allocation0 [shape = 'u32[]', space=smem, size = 0x4, offset = 0x4, fixed_abs, tag = 'smem constant byte address 0x4 - core index']
  #allocation1 [shape = 'u32[72,128]{1,0:T(1,128)}', space=vmem, size = 0x9000, scoped, tag = 'internal scratch']
  #allocation2 [shape = 's32[1]{0}', space=sflag, size = 0x4, scoped, tag = 'scoped memory for tpu_custom_call.1']
  #allocation3 [shape = 'u8[512]{0}', space=smem, size = 0x200, scoped, tag = 'prefetched SMEM operand 0']
  %s0 = inlined_call_operand.hbm [shape: f32[2], index: 0, kind: input, shape index: {}]
  %s1 = inlined_call_operand.vmem [shape: f32[2,16,128], index: 1, kind: input, shape index: {}]
  %s2 = inlined_call_operand.vmem [shape: f32[2,16,1], index: 2, kind: input, shape index: {}]
  %s3 = inlined_call_operand.vmem [shape: f32[2,1,128], index: 3, kind: input, shape index: {}]
  %s4 = inlined_call_operand.hbm [shape: f32[2,16,128], index: 4, kind: output, shape index: {}]
  %s5 = sld [smem:[#allocation0]]
  $region52: #{tpu_custom_call.1} parent=0
    _
  %s7 = ssub.s32 1, %s5
  %s8 = scalar_select 0, %s7, %s5
  %s10 = sshll.u32 %s0, 4
  %s11 = int_to_ptr.hbm [resolvable:$true] %s10
  %13 = dma.hbm_to_smem %s11, 16, [#allocation3], [#allocation2]
  %15 = dma.done [#allocation2], 16
  %16 = sfence
  $region1: #{tpu_custom_call.1} parent=0
    #allocation4 [shape = 'u8[16384]{0}', space=vmem, size = 0x4000, scoped, tag = 'output window, operand 0']
    #allocation5 [shape = 's32[2]{0}', space=sflag, size = 0x8, scoped, tag = 'scoped memory for tpu_custom_call.1']
    %17 = vsyncpa [#allocation5], 0
    %s18 = scalar_lea.sflag [#allocation5], 1
    %19 = vsyncpa %s18, 0
    loop: start=0, step=1, limit=4
    $region2: #{tpu_custom_call.1} parent=1 // loop_pre_header
      _
    $region3: #{tpu_custom_call.1} parent=1 // loop_header
      %s21 = sphi 0, %s25
      %p22 = scmp.ge.s32.totalorder %s21, 4
      %s31 = sphi 0, %s33
      %s34 = sphi 0, %s31
      %s35 = sphi 0, %s34
      %s51 = sphi 0, %s35
      %s57 = sphi 0, %s59
      %s60 = sphi 0, %s57
      %s61 = sphi 0, %s60
      %s77 = sphi 0, %s61
      %s83 = sphi 0, %s85
      %s86 = sphi 0, %s83
      %s87 = sphi 0, %s86
      %s103 = sphi 0, %s87
      %s109 = sphi 0, %s111
      %s112 = sphi 0, %s109
      %s113 = sphi 0, %s112
      %s129 = sphi 0, %s113
    $region4: #{tpu_custom_call.1} parent=1 // loop_header_branch
      %24 = sbr.rel (%p22) target = $region8
    $region5: #{tpu_custom_call.1} parent=1 // loop_body
      %s26 = ssub.s32 %s21, 1
      %s27 = ssub.s32 %s21, 2
      %s28 = sadd.s32 %s21, 1
      %s29 = ssub.s32 %s21, %s28
      %p30 = scmp.eq.s32.totalorder %s29, 0
      %s32 = sadd.s32 %s31, 1
      %s33 = scalar_select %p30, %s31, %s32
      %p36 = pneg %p30
      %p37 = scmp.eq.s32.totalorder %s21, 1
      %p38 = por %p36, %p37
      %p39 = scmp.ne.s32.totalorder %s31, %s34
      %p40 = scmp.eq.s32.totalorder %s21, 0
      %p41 = por %p39, %p40
      %p42 = scmp.ne.s32.totalorder %s31, %s34
      %p43 = scmp.eq.s32.totalorder %s26, 1
      %p44 = por %p42, %p43
      %p45 = scmp.ne.s32.totalorder %s34, %s35
      %p46 = scmp.eq.s32.totalorder %s26, 0
      %p47 = por %p45, %p46
      %p48 = scmp.ne.s32.totalorder %s34, %s35
      %p49 = scmp.eq.s32.totalorder %s27, 1
      %p50 = por %p48, %p49
      %p52 = scmp.ne.s32.totalorder %s35, %s51
      %p53 = scmp.eq.s32.totalorder %s27, 0
      %p54 = por %p52, %p53
      %s55 = ssub.s32 %s21, %s28
      %p56 = scmp.eq.s32.totalorder %s55, 0
      %s58 = sadd.s32 %s57, 1
      %s59 = scalar_select %p56, %s57, %s58
      %p62 = pneg %p56
      %p63 = scmp.eq.s32.totalorder %s21, 1
      %p64 = por %p62, %p63
      %p65 = scmp.ne.s32.totalorder %s57, %s60
      %p66 = scmp.eq.s32.totalorder %s21, 0
      %p67 = por %p65, %p66
      %p68 = scmp.ne.s32.totalorder %s57, %s60
      %p69 = scmp.eq.s32.totalorder %s26, 1
      %p70 = por %p68, %p69
      %p71 = scmp.ne.s32.totalorder %s60, %s61
      %p72 = scmp.eq.s32.totalorder %s26, 0
      %p73 = por %p71, %p72
      %p74 = scmp.ne.s32.totalorder %s60, %s61
      %p75 = scmp.eq.s32.totalorder %s27, 1
      %p76 = por %p74, %p75
      %p78 = scmp.ne.s32.totalorder %s61, %s77
      %p79 = scmp.eq.s32.totalorder %s27, 0
      %p80 = por %p78, %p79
      %s81 = ssub.s32 %s21, %s28
      %p82 = scmp.eq.s32.totalorder %s81, 0
      %s84 = sadd.s32 %s83, 1
      %s85 = scalar_select %p82, %s83, %s84
      %p88 = pneg %p82
      %p89 = scmp.eq.s32.totalorder %s21, 1
      %p90 = por %p88, %p89
      %p91 = scmp.ne.s32.totalorder %s83, %s86
      %p92 = scmp.eq.s32.totalorder %s21, 0
      %p93 = por %p91, %p92
      %p94 = scmp.ne.s32.totalorder %s83, %s86
      %p95 = scmp.eq.s32.totalorder %s26, 1
      %p96 = por %p94, %p95
      %p97 = scmp.ne.s32.totalorder %s86, %s87
      %p98 = scmp.eq.s32.totalorder %s26, 0
      %p99 = por %p97, %p98
      %p100 = scmp.ne.s32.totalorder %s86, %s87
      %p101 = scmp.eq.s32.totalorder %s27, 1
      %p102 = por %p100, %p101
      %p104 = scmp.ne.s32.totalorder %s87, %s103
      %p105 = scmp.eq.s32.totalorder %s27, 0
      %p106 = por %p104, %p105
      %s107 = ssub.s32 %s21, %s28
      %p108 = scmp.eq.s32.totalorder %s107, 0
      %s110 = sadd.s32 %s109, 1
      %s111 = scalar_select %p108, %s109, %s110
      %p114 = pneg %p108
      %p115 = scmp.eq.s32.totalorder %s21, 1
      %p116 = por %p114, %p115
      %p117 = scmp.ne.s32.totalorder %s109, %s112
      %p118 = scmp.eq.s32.totalorder %s21, 0
      %p119 = por %p117, %p118
      %p120 = scmp.ne.s32.totalorder %s109, %s112
      %p121 = scmp.eq.s32.totalorder %s26, 1
      %p122 = por %p120, %p121
      %p123 = scmp.ne.s32.totalorder %s112, %s113
      %p124 = scmp.eq.s32.totalorder %s26, 0
      %p125 = por %p123, %p124
      %p126 = scmp.ne.s32.totalorder %s112, %s113
      %p127 = scmp.eq.s32.totalorder %s27, 1
      %p128 = por %p126, %p127
      %p130 = scmp.ne.s32.totalorder %s113, %s129
      %p131 = scmp.eq.s32.totalorder %s27, 0
      %p132 = por %p130, %p131
      %p133 = scmp.le.s32.totalorder 1, %s21
      %p134 = scmp.lt.s32.totalorder %s21, 3
      %p135 = pnand %p133, %p134
      %p136 = pneg %p135
      // Predicated region
      $region9: #{tpu_custom_call.1} parent=5 // pred_check
        _
      $region10: #{tpu_custom_call.1} parent=5 // pred_check_branch
        %138 = sbr.rel (%p135) target = $region12
      $region11: #{tpu_custom_call.1} parent=5 // pred_region
        %s139 = ssub.s32 %s21, 1
      $region12: #{tpu_custom_call.1} parent=5 // pred_fallthru
        _
      %p140 = scmp.lt.s32.totalorder %s21, 2
      // Predicated region
      $region13: #{tpu_custom_call.1} parent=5 // pred_check
        %p141 = pneg %p140
      $region14: #{tpu_custom_call.1} parent=5 // pred_check_branch
        %143 = sbr.rel (%p141) target = $region16
      $region15: #{tpu_custom_call.1} parent=5 // pred_region
        // Predicated region
        $region17: #{tpu_custom_call.1} parent=15 // pred_check
          %p144 = pneg %p41
        $region18: #{tpu_custom_call.1} parent=15 // pred_check_branch
          %146 = sbr.rel (%p144) target = $region20
        $region19: #{tpu_custom_call.1} parent=15 // pred_region
          %p147 = scmp.lt.s32.totalorder %s21, 1
          %s148 = scalar_select %p147, %s21, 1
          %s149 = smul.addr %s148, 2
          %s150 = smul.addr %s149, 8
          %s151 = scalar_lea.vmem %s1, %s150
        $region20: #{tpu_custom_call.1} parent=15 // pred_fallthru
          _
        // Predicated region
        $region21: #{tpu_custom_call.1} parent=15 // pred_check
          %p152 = pneg %p67
        $region22: #{tpu_custom_call.1} parent=15 // pred_check_branch
          %154 = sbr.rel (%p152) target = $region24
        $region23: #{tpu_custom_call.1} parent=15 // pred_region
          %p155 = scmp.lt.s32.totalorder %s21, 1
          %s156 = scalar_select %p155, %s21, 1
          %s157 = smul.addr %s156, 2
          %s158 = smul.addr %s157, 8
          %s159 = scalar_lea.vmem %s2, %s158
        $region24: #{tpu_custom_call.1} parent=15 // pred_fallthru
          _
        // Predicated region
        $region25: #{tpu_custom_call.1} parent=15 // pred_check
          %p160 = pneg %p93
        $region26: #{tpu_custom_call.1} parent=15 // pred_check_branch
          %162 = sbr.rel (%p160) target = $region28
        $region27: #{tpu_custom_call.1} parent=15 // pred_region
          %p163 = scmp.lt.s32.totalorder %s21, 1
          %s164 = scalar_select %p163, %s21, 1
          %s165 = scalar_lea.vmem %s3, %s164
        $region28: #{tpu_custom_call.1} parent=15 // pred_fallthru
          _
      $region16: #{tpu_custom_call.1} parent=5 // pred_fallthru
        _
      %p166 = scmp.le.s32.totalorder 1, %s21
      %p167 = scmp.lt.s32.totalorder %s21, 3
      %p168 = pnand %p166, %p167
      %p169 = pneg %p168
      // Predicated region
      $region29: #{tpu_custom_call.1} parent=5 // pred_check
        _
      $region30: #{tpu_custom_call.1} parent=5 // pred_check_branch
        %171 = sbr.rel (%p168) target = $region32
      $region31: #{tpu_custom_call.1} parent=5 // pred_region
        %s172 = ssub.s32 %s21, 1
        %p173 = scmp.lt.s32.totalorder %s26, 1
        %s174 = scalar_select %p173, %s26, 1
        %s175 = smul.addr %s174, 2
        %s176 = smul.addr %s175, 8
        %s177 = scalar_lea.vmem %s1, %s176
        %p178 = pneg %p47
        %p179 = pneg %p44
        %p180 = scmp.lt.s32.totalorder %s26, 1
        %s181 = scalar_select %p180, %s26, 1
        %s182 = smul.addr %s181, 2
        %s183 = smul.addr %s182, 8
        %s184 = scalar_lea.vmem %s2, %s183
        %p185 = pneg %p73
        %p186 = pneg %p70
        %p187 = scmp.lt.s32.totalorder %s26, 1
        %s188 = scalar_select %p187, %s26, 1
        %s189 = scalar_lea.vmem %s3, %s188
        %p190 = pneg %p99
        %p191 = pneg %p96
        %p192 = pneg %p125
        %p193 = pneg %p122
        %s194 = sand.u32 %s112, 1
        %s195 = scalar_lea.sflag [#allocation5], %s194
        %s196 = sand.u32 %s112, 1
        %s197 = smul.addr %s196, 16
        %s198 = scalar_lea.vmem [#allocation4], %s197
        %p199 = scmp.lt.s32.totalorder %s26, 1
        %s200 = scalar_select %p199, %s26, 1
        %s201 = smul.addr %s200, 2
        %s202 = smul.addr %s201, 8
        %s203 = scalar_lea.vmem %s1, %s202
        %p204 = scmp.lt.s32.totalorder %s26, 1
        %s205 = scalar_select %p204, %s26, 1
        %s206 = smul.addr %s205, 2
        %s207 = smul.addr %s206, 8
        %s208 = scalar_lea.vmem %s2, %s207
        %p209 = scmp.lt.s32.totalorder %s26, 1
        %s210 = scalar_select %p209, %s26, 1
        %s211 = scalar_lea.vmem %s3, %s210
        %v212 = vld [vmem:[%s203] sm:$0xff]
        %v213 = vld [vmem:[%s203 + $0x8] sm:$0xff]
        %v214 = vld [vmem:[%s208] sm:$0xff]
        %v215 = vld [vmem:[%s208 + $0x8] sm:$0xff]
        %v216 = vld [vmem:[%s211] sm:$0x1]
        %217 = vmax.xlane.f32.xlu0 %v212
        %v218 = vpop.xlane.xlu0 %217
        %219 = vmax.xlane.f32.xlu0 %v213
        %v220 = vpop.xlane.xlu0 %219
        %v221 = vmax.f32 %v212, %v213
        %v222 = vrot.slane %v221, 4
        %v223 = vmax.f32 %v221, %v222
        %v224 = vrot.slane %v223, 2
        %v225 = vmax.f32 %v223, %v224
        %v226 = vrot.slane %v225, 1
        %v227 = vmax.f32 %v225, %v226
        %v228 = vsub.f32 %v212, %v218
        %v229 = vsub.f32 %v213, %v220
        %v230 = vmul.f32 %v228, 1.442695
        %v231 = vpow.pop %v230
        %v232 = vmul.f32 %v229, 1.442695
        %v233 = vpow.pop %v232
        %v234 = vsub.f32 %v212, %v227
        %v235 = vsub.f32 %v213, %v227
        %v236 = vmul.f32 %v234, 1.442695
        %v237 = vpow.pop %v236
        %v238 = vmul.f32 %v235, 1.442695
        %v239 = vpow.pop %v238
        loop: start=0, step=1, limit=20
        $region33: #{tpu_custom_call.1} parent=31 // loop_pre_header
          _
        $region34: #{tpu_custom_call.1} parent=31 // loop_header
          %s241 = sphi 0, %s245
          %p242 = scmp.ge.s32.totalorder %s241, 20
          %v246 = vphi 0.0, %v274
          %v247 = vphi 0.0, %v275
          %v248 = vphi 0.0, %v320
        $region35: #{tpu_custom_call.1} parent=31 // loop_header_branch
          %244 = sbr.rel (%p242) target = $region39
        $region36: #{tpu_custom_call.1} parent=31 // loop_body
          %vm249 = vcmask 1040384
          %v250 = vsel %vm249, %v248, -inf
          %251 = vmax.xlane.f32.xlu0 %v250
          %v252 = vpop.xlane.xlu0 %251
          %v253 = vsub.f32 %v248, %v252
          %v254 = vmul.f32 %v253, 1.442695
          %v255 = vpow.pop %v254
          %v257 = vperm.slane %v255, 0
          %v259 = vmul.f32 %v231, %v257
          %v260 = vmul.f32 %v233, %v257
          %261 = vadd.xlane.f32.xlu0 %v259
          %v262 = vpop.xlane.xlu0 %261
          %263 = vadd.xlane.f32.xlu0 %v260
          %v264 = vpop.xlane.xlu0 %263
          %v265 = vperm.slane %v252, 0
          %v266 = vadd.f32 %v218, %v265
          %v267 = vadd.f32 %v220, %v265
          %v268 = vlog2.pop %v262
          %v269 = vmul.f32 %v268, 0.6931472
          %v270 = vlog2.pop %v264
          %v271 = vmul.f32 %v270, 0.6931472
          %v272 = vadd.f32 %v266, %v269
          %v273 = vadd.f32 %v267, %v271
          %v274 = vsub.f32 %v214, %v272
          %v275 = vsub.f32 %v215, %v273
          %vm276 = vcmask 7168
          %v277 = vsel %vm276, %v274, -inf
          %v278 = vsel %vm276, %v275, -inf
          %v279 = vmax.f32 %v277, %v278
          %v280 = vrot.slane %v279, 4
          %v281 = vmax.f32 %v279, %v280
          %v282 = vrot.slane %v281, 2
          %v283 = vmax.f32 %v281, %v282
          %v284 = vrot.slane %v283, 1
          %v285 = vmax.f32 %v283, %v284
          %v286 = vsub.f32 %v274, %v285
          %v287 = vsub.f32 %v275, %v285
          %v288 = vmul.f32 %v286, 1.442695
          %v289 = vpow.pop %v288
          %v290 = vmul.f32 %v287, 1.442695
          %v291 = vpow.pop %v290
          %293 = vset.pattern.permute.xlu0 0
          %294 = vperm.xlu0 %293, %v289
          %v295 = vpop.permute.xlu0 %294
          %298 = vset.pattern.permute.xlu0 0
          %299 = vperm.xlu0 %298, %v291
          %v300 = vpop.permute.xlu0 %299
          %v302 = vmul.f32 %v237, %v295
          %v303 = vmul.f32 %v239, %v300
          %v304 = vadd.f32 %v302, %v303
          %v305 = vrot.slane %v304, 4
          %v306 = vadd.f32 %v304, %v305
          %v307 = vrot.slane %v306, 2
          %v308 = vadd.f32 %v306, %v307
          %v309 = vrot.slane %v308, 1
          %v310 = vadd.f32 %v308, %v309
          %312 = vset.pattern.permute.xlu0 0
          %313 = vperm.xlu0 %312, %v285
          %v314 = vpop.permute.xlu0 %313
          %v316 = vadd.f32 %v227, %v314
          %v317 = vlog2.pop %v310
          %v318 = vmul.f32 %v317, 0.6931472
          %v319 = vadd.f32 %v316, %v318
          %v320 = vsub.f32 %v216, %v319
        $region37: #{tpu_custom_call.1} parent=31 // loop_footer
          %s245 = sadd.s32 1, %s241
        $region38: #{tpu_custom_call.1} parent=31 // loop_footer_branch
          %240 = sbr.rel target = $region34
        $region39: #{tpu_custom_call.1} parent=31 // loop_exit
          _
        %322 = vset.pattern.permute.xlu0 0
        %323 = vperm.xlu0 %322, %v246
        %v324 = vpop.permute.xlu0 %323
        %327 = vset.pattern.permute.xlu0 0
        %328 = vperm.xlu0 %327, %v247
        %v329 = vpop.permute.xlu0 %328
        %v331 = vadd.f32 %v212, %v324
        %v332 = vadd.f32 %v213, %v329
        %v334 = vperm.slane %v248, 0
        %v336 = vadd.f32 %v331, %v334
        %v337 = vadd.f32 %v332, %v334
        %s338 = sld [smem:[#allocation3 + %s26]]
        %v339 = vstv %s338
        %v340 = vsub.f32 %v336, %v339
        %v341 = vsub.f32 %v337, %v339
        %342 = vst [vmem:[%s198] sm:$0xff] %v340
        %343 = vst [vmem:[%s198 + $0x8] sm:$0xff] %v341
        %s344 = sand.u32 %s112, 1
        %s345 = scalar_lea.sflag [#allocation5], %s344
        %s346 = sand.u32 %s112, 1
        %s347 = smul.addr %s346, 16
        %s348 = scalar_lea.vmem [#allocation4], %s347
        // Predicated region
        $region40: #{tpu_custom_call.1} parent=31 // pred_check
          %p349 = pneg %p122
        $region41: #{tpu_custom_call.1} parent=31 // pred_check_branch
          %351 = sbr.rel (%p349) target = $region43
        $region42: #{tpu_custom_call.1} parent=31 // pred_region
          %353 = vsyncadd %s345, 0
          %s354 = smul.addr %s26, 2
          %s355 = smul.addr %s354, 8
          %s356 = scalar_lea.hbm %s4, %s355
          %s357 = sshll.u32 %s348, 4
          %s358 = int_to_ptr.vmem [resolvable:$true] %s357
          %s359 = sshll.u32 %s356, 4
          %s360 = int_to_ptr.hbm [resolvable:$true] %s359
          %365 = dma.vmem_to_hbm [thread:$0]  %s358, 256, %s360, %s345, 128, 128, 8
        $region43: #{tpu_custom_call.1} parent=31 // pred_fallthru
          _
      $region32: #{tpu_custom_call.1} parent=5 // pred_fallthru
        _
      %p366 = scmp.le.s32.totalorder 2, %s21
      // Predicated region
      $region44: #{tpu_custom_call.1} parent=5 // pred_check
        %p367 = pneg %p366
      $region45: #{tpu_custom_call.1} parent=5 // pred_check_branch
        %369 = sbr.rel (%p367) target = $region47
      $region46: #{tpu_custom_call.1} parent=5 // pred_region
        %s370 = ssub.s32 %s21, 2
        // Predicated region
        $region48: #{tpu_custom_call.1} parent=46 // pred_check
          %p371 = pneg %p128
        $region49: #{tpu_custom_call.1} parent=46 // pred_check_branch
          %373 = sbr.rel (%p371) target = $region51
        $region50: #{tpu_custom_call.1} parent=46 // pred_region
          %s374 = sand.u32 %s113, 1
          %s375 = scalar_lea.sflag [#allocation5], %s374
          %s376 = sand.u32 %s113, 1
          %s377 = smul.addr %s376, 16
          %s378 = scalar_lea.vmem [#allocation4], %s377
          %380 = dma.done %s375, 256
        $region51: #{tpu_custom_call.1} parent=46 // pred_fallthru
          _
      $region47: #{tpu_custom_call.1} parent=5 // pred_fallthru
        _
    $region6: #{tpu_custom_call.1} parent=1 // loop_footer
      %s25 = sadd.s32 1, %s21
    $region7: #{tpu_custom_call.1} parent=1 // loop_footer_branch
      %20 = sbr.rel target = $region3
    $region8: #{tpu_custom_call.1} parent=1 // loop_exit
      _
    %381 = vsyncpa [#allocation5], 1
    %s382 = scalar_lea.sflag [#allocation5], 1
    %383 = vsyncpa %s382, 1

</llo_original>
